<compile_context>
chip_gen: v7x
topology: tpu7x:2x2x1
jax: 0.10.0
libtpu: 0.0.40
codegen_flags: <defaults>
</compile_context>

<pallas_src>
import jax
import jax.numpy as jnp
from jax.experimental import pallas as pl
from jax.experimental.pallas import tpu as pltpu


# --------------------------------------------------------------------------
# Kernel
# --------------------------------------------------------------------------
def _make_kernel(n_feat: int):
    """Build the kernel body for a fixed number of input features."""

    def kernel(*refs):
        feat_refs = refs[:n_feat]                  # each (TB, D), batch on sublanes
        (cw_ref,    # (D, 1)   conv1x1 weight column
         g_ref,     # (D, 1)   layernorm gamma
         b_ref,     # (D, 1)   layernorm beta
         lw_ref,    # (OUT, D) linear weight (torch layout)
         lb_ref,    # (OUT, 1) linear bias
         proj_ref,  # (OUT, TB) output: projected aggregate (lane-dense)
         attw_ref,  # (F, TB)   output: attention weights   (lane-dense)
         ) = refs[n_feat:]

        f32 = jnp.float32
        cw = cw_ref[...].astype(f32)               # (D, 1)

        # Per-feature transpose (TB, D) -> (D, TB).  Batch lands on the lane
        # axis, so every elementwise / reduction op below is lane-dense even
        # for D < 128.  No concat, no big packed intermediate.
        xts = [r[...].astype(f32).T for r in feat_refs]        # F x (D, TB)

        # Conv1d(D -> 1, kernel=1) logits per feature: column-weight multiply
        # + sublane reduction.  The conv bias is a single scalar shared by all
        # F logits, so it cancels exactly in the softmax and is omitted.
        logits = [jnp.sum(x * cw, axis=0, keepdims=True) for x in xts]  # F x (1, TB)

        # Softmax over the F features, computed feature-wise on (1, TB) rows.
        m = logits[0]
        for f in range(1, n_feat):
            m = jnp.maximum(m, logits[f])
        es = [jnp.exp(l - m) for l in logits]
        denom = es[0]
        for f in range(1, n_feat):
            denom = denom + es[f]
        inv = pl.reciprocal(denom, approx=True)     # EUP slot (~free)
        inv = inv * (2.0 - denom * inv)             # one Newton step -> f32 accuracy
        ws = [e * inv for e in es]                  # F x (1, TB)

        # Attention-weighted sum over features -> (D, TB).
        agg = xts[0] * ws[0]
        for f in range(1, n_feat):
            agg = agg + xts[f] * ws[f]

        # LayerNorm over D (sublane axis); eps matches torch default 1e-5.
        mean = jnp.mean(agg, axis=0, keepdims=True)             # (1, TB)
        centered = agg - mean
        var = jnp.mean(centered * centered, axis=0, keepdims=True)
        inv_std = jax.lax.rsqrt(var + 1e-5)
        normed = centered * inv_std * g_ref[...].astype(f32) \
            + b_ref[...].astype(f32)                            # (D, TB)

        # Linear(D -> OUT) + ReLU on the MXU, lane-dense (OUT, TB) output.
        proj = jnp.dot(lw_ref[...].astype(f32), normed,
                       preferred_element_type=f32)              # (OUT, TB)
        proj = jnp.maximum(proj + lb_ref[...].astype(f32), 0.0)
        # TODO(synk): nn.Dropout(p=0.1) is identity in eval mode; training-mode
        # dropout (pltpu.prng_random_bits mask) not emitted here.

        proj_ref[...] = proj.astype(proj_ref.dtype)
        attw_ref[...] = jnp.concatenate(ws, axis=0).astype(attw_ref.dtype)

    return kernel


# --------------------------------------------------------------------------
# Tiling / wrapper
# --------------------------------------------------------------------------
def _round_up(x: int, m: int) -> int:
    return ((x + m - 1) // m) * m


def _choose_tiling(batch: int, d: int, out_dim: int, n_feat: int,
                   in_itemsize: int):
    """Pick (TB, vmem_limit_bytes). TB is always a multiple of 128 (it is the
    lane dim of the outputs); ragged final block handles any batch size."""
    try:
        vmem_cap = int(pltpu.get_tpu_info().vmem_capacity_bytes)
    except Exception:
        vmem_cap = 64 << 20                        # conservative (v7x)

    # Per-batch-row bytes resident in VMEM during one grid step:
    #   2x double-buffered input tiles, in-kernel f32 transposed copies,
    #   ~4 (D,TB) f32 temporaries, small (1,TB) softmax temps,
    #   2x double-buffered outputs.
    bytes_per_row = (2 * n_feat * d * in_itemsize
                     + 4 * (n_feat * d + 4 * d + 2 * (out_dim + n_feat)
                            + 3 * n_feat + 4))
    budget = max(1 << 20, vmem_cap // 3)
    cap = max(128, (budget // bytes_per_row) // 128 * 128)
    tb = min(2048, cap)
    if batch > 256:
        # Keep >= 2 grid steps so both v7x TensorCores get work ("parallel").
        tb = min(tb, _round_up(pl.cdiv(batch, 2), 128))
    tb = min(tb, _round_up(batch, 128))            # don't exceed (padded) batch
    tb = max(tb, 128)

    vmem_limit = int(min(max(2 * bytes_per_row * tb + (2 << 20), 16 << 20),
                         (vmem_cap * 3) // 4))
    return tb, vmem_limit


def attentive_aggregator(features, params):
    """features: list of (B, D) float arrays (f32 or bf16).
    params use torch-native shapes:
       conv_w (1, D, 1), conv_b (1,), ln_gamma (D,), ln_beta (D,),
       lin_w (OUT, D), lin_b (OUT,).
    Returns (proj (B, OUT), attention_weights (B, 1, F))."""
    n_feat = len(features)
    B, D = features[0].shape
    lin_w = jnp.asarray(params["lin_w"])           # (OUT, D) torch layout
    OUT = lin_w.shape[0]

    # NOTE: params["conv_b"] is intentionally unused — a single scalar bias
    # shared by all F logits cancels exactly in the softmax.
    conv_w = jnp.asarray(params["conv_w"]).reshape(D, 1)
    gamma = jnp.asarray(params["ln_gamma"]).reshape(D, 1)
    beta = jnp.asarray(params["ln_beta"]).reshape(D, 1)
    lin_b = jnp.asarray(params["lin_b"]).reshape(OUT, 1)

    in_itemsize = jnp.dtype(features[0].dtype).itemsize
    TB, vmem_limit = _choose_tiling(B, D, OUT, n_feat, in_itemsize)
    grid = (pl.cdiv(B, TB),)

    feat_spec = pl.BlockSpec((TB, D), lambda i: (i, 0))

    def _full(shape):
        return pl.BlockSpec(shape, lambda i, _n=len(shape): (0,) * _n)

    in_specs = [feat_spec] * n_feat + [
        _full((D, 1)),                 # conv_w
        _full((D, 1)),                 # gamma
        _full((D, 1)),                 # beta
        _full((OUT, D)),               # lin_w
        _full((OUT, 1)),               # lin_b
    ]
    out_specs = [
        pl.BlockSpec((OUT, TB), lambda i: (0, i)),
        pl.BlockSpec((n_feat, TB), lambda i: (0, i)),
    ]

    param_bytes = 4 * (3 * D + OUT * D + OUT)
    cost = pl.CostEstimate(
        flops=B * (4 * n_feat * D + 2 * D * OUT + 8 * D + 4 * n_feat + OUT),
        transcendentals=B * (n_feat + 2),
        bytes_accessed=in_itemsize * n_feat * B * D
        + 4 * B * (OUT + n_feat) + param_bytes,
    )

    proj_t, attw_t = pl.pallas_call(
        _make_kernel(n_feat),
        out_shape=(
            jax.ShapeDtypeStruct((OUT, B), jnp.float32),
            jax.ShapeDtypeStruct((n_feat, B), jnp.float32),
        ),
        grid_spec=pltpu.PrefetchScalarGridSpec(
            num_scalar_prefetch=0,
            grid=grid,
            in_specs=in_specs,
            out_specs=out_specs,
        ),
        compiler_params=pltpu.CompilerParams(
            dimension_semantics=("parallel",),
            vmem_limit_bytes=vmem_limit,
        ),
        cost_estimate=cost,
    )(*features, conv_w, gamma, beta, lin_w, lin_b)

    proj = proj_t.T                                # (B, OUT)
    attw = attw_t.T.reshape(B, 1, n_feat)          # PyTorch shape (B, 1, F)
    return proj, attw


# --------------------------------------------------------------------------
# Plain-JAX reference mirroring the PyTorch forward (eval mode)
# --------------------------------------------------------------------------
def _reference(features, params):
    x = jnp.stack(features, axis=-1)                            # (B, D, F)
    w = jnp.asarray(params["conv_w"]).reshape(-1)               # (D,)
    logits = jnp.einsum("bdf,d->bf", x, w) + jnp.asarray(params["conv_b"])[0]
    weights = jax.nn.softmax(logits, axis=-1)                   # (B, F)
    agg = jnp.einsum("bdf,bf->bd", x, weights)                  # (B, D)
    mean = jnp.mean(agg, axis=-1, keepdims=True)
    var = jnp.mean((agg - mean) ** 2, axis=-1, keepdims=True)
    normed = (agg - mean) / jnp.sqrt(var + 1e-5)
    normed = normed * params["ln_gamma"] + params["ln_beta"]
    proj = jnp.maximum(normed @ params["lin_w"].T + params["lin_b"], 0.0)
    return proj, weights[:, None, :]


# --------------------------------------------------------------------------
# Demo / self-test
# --------------------------------------------------------------------------
def _run_case(B, D, OUT, NFEAT, seed):
    key = jax.random.PRNGKey(seed)
    kf, kcw, kcb, klw, klb = jax.random.split(key, 5)

    features = [
        jax.random.normal(jax.random.fold_in(kf, i), (B, D), dtype=jnp.float32)
        for i in range(NFEAT)
    ]
    params = {
        # Conv1d(input_dim, 1, kernel_size=1): torch weight (1, D, 1), bias (1,)
        "conv_w": 0.1 * jax.random.normal(kcw, (1, D, 1), dtype=jnp.float32),
        "conv_b": 0.1 * jax.random.normal(kcb, (1,), dtype=jnp.float32),
        # LayerNorm(input_dim): default torch init
        "ln_gamma": jnp.ones((D,), dtype=jnp.float32),
        "ln_beta": jnp.zeros((D,), dtype=jnp.float32),
        # Linear(input_dim, output_dim): torch weight (OUT, D), bias (OUT,)
        "lin_w": 0.1 * jax.random.normal(klw, (OUT, D), dtype=jnp.float32),
        "lin_b": 0.1 * jax.random.normal(klb, (OUT,), dtype=jnp.float32),
    }

    proj, attw = attentive_aggregator(features, params)
    jax.block_until_ready((proj, attw))

    proj_ref, attw_ref = _reference(features, params)
    assert proj.shape == (B, OUT) and attw.shape == (B, 1, NFEAT)
    assert jnp.allclose(proj, proj_ref, atol=1e-3, rtol=1e-3)
    assert jnp.allclose(attw, attw_ref, atol=1e-3, rtol=1e-3)


if __name__ == "__main__":
    # Small case: single (ragged) tile, grid=(1,).
    _run_case(B=8, D=32, OUT=16, NFEAT=8, seed=0)
    # Batch-tiled case: B=600 -> TB=384, grid=(2,), ragged final block, to
    # exercise the multi-step parallel pipeline without any host-side padding.
    _run_case(B=600, D=32, OUT=16, NFEAT=4, seed=1)
    print("KERNEL_OK")
</pallas_src>

<mosaic_0001>
module attributes {stable_mosaic.version = 11 : i64} {
  func.func @kernel(%arg0: i32, %arg1: memref<128x32xf32, #tpu.memory_space<vmem>>, %arg2: memref<128x32xf32, #tpu.memory_space<vmem>>, %arg3: memref<128x32xf32, #tpu.memory_space<vmem>>, %arg4: memref<128x32xf32, #tpu.memory_space<vmem>>, %arg5: memref<128x32xf32, #tpu.memory_space<vmem>>, %arg6: memref<128x32xf32, #tpu.memory_space<vmem>>, %arg7: memref<128x32xf32, #tpu.memory_space<vmem>>, %arg8: memref<128x32xf32, #tpu.memory_space<vmem>>, %arg9: memref<32x1xf32, #tpu.memory_space<vmem>>, %arg10: memref<32x1xf32, #tpu.memory_space<vmem>>, %arg11: memref<32x1xf32, #tpu.memory_space<vmem>>, %arg12: memref<16x32xf32, #tpu.memory_space<vmem>>, %arg13: memref<16x1xf32, #tpu.memory_space<vmem>>, %arg14: memref<16x128xf32, #tpu.memory_space<vmem>>, %arg15: memref<8x128xf32, #tpu.memory_space<vmem>>) attributes {dimension_semantics = [#tpu.dimension_semantics<parallel>], iteration_bounds = array<i64: 1>, scalar_prefetch = 0 : i64, scratch_operands = 0 : i64, tpu.core_type = #tpu.core_type<tc>, window_params = [{transform_indices = @transform_0, window_bounds = array<i64: 128, 32>}, {transform_indices = @transform_1, window_bounds = array<i64: 128, 32>}, {transform_indices = @transform_2, window_bounds = array<i64: 128, 32>}, {transform_indices = @transform_3, window_bounds = array<i64: 128, 32>}, {transform_indices = @transform_4, window_bounds = array<i64: 128, 32>}, {transform_indices = @transform_5, window_bounds = array<i64: 128, 32>}, {transform_indices = @transform_6, window_bounds = array<i64: 128, 32>}, {transform_indices = @transform_7, window_bounds = array<i64: 128, 32>}, {pipeline_mode = #tpu.pipeline_mode<synchronous>, transform_indices = @transform_8, window_bounds = array<i64: 32, 1>}, {pipeline_mode = #tpu.pipeline_mode<synchronous>, transform_indices = @transform_9, window_bounds = array<i64: 32, 1>}, {pipeline_mode = #tpu.pipeline_mode<synchronous>, transform_indices = @transform_10, window_bounds = array<i64: 32, 1>}, {pipeline_mode = #tpu.pipeline_mode<synchronous>, transform_indices = @transform_11, window_bounds = array<i64: 16, 32>}, {pipeline_mode = #tpu.pipeline_mode<synchronous>, transform_indices = @transform_12, window_bounds = array<i64: 16, 1>}, {transform_indices = @transform_13, window_bounds = array<i64: 16, 128>}, {transform_indices = @transform_14, window_bounds = array<i64: 8, 128>}]} {
    %c0 = arith.constant 0 : index
    %c0_0 = arith.constant 0 : index
    %0 = vector.load %arg9[%c0, %c0_0] : memref<32x1xf32, #tpu.memory_space<vmem>>, vector<32x1xf32>
    %c0_1 = arith.constant 0 : index
    %c0_2 = arith.constant 0 : index
    %1 = vector.load %arg1[%c0_1, %c0_2] : memref<128x32xf32, #tpu.memory_space<vmem>>, vector<128x32xf32>
    %2 = tpu.transpose %1, [1, 0] : vector<128x32xf32> -> vector<32x128xf32>
    %c0_3 = arith.constant 0 : index
    %c0_4 = arith.constant 0 : index
    %3 = vector.load %arg2[%c0_3, %c0_4] : memref<128x32xf32, #tpu.memory_space<vmem>>, vector<128x32xf32>
    %4 = tpu.transpose %3, [1, 0] : vector<128x32xf32> -> vector<32x128xf32>
    %c0_5 = arith.constant 0 : index
    %c0_6 = arith.constant 0 : index
    %5 = vector.load %arg3[%c0_5, %c0_6] : memref<128x32xf32, #tpu.memory_space<vmem>>, vector<128x32xf32>
    %6 = tpu.transpose %5, [1, 0] : vector<128x32xf32> -> vector<32x128xf32>
    %c0_7 = arith.constant 0 : index
    %c0_8 = arith.constant 0 : index
    %7 = vector.load %arg4[%c0_7, %c0_8] : memref<128x32xf32, #tpu.memory_space<vmem>>, vector<128x32xf32>
    %8 = tpu.transpose %7, [1, 0] : vector<128x32xf32> -> vector<32x128xf32>
    %c0_9 = arith.constant 0 : index
    %c0_10 = arith.constant 0 : index
    %9 = vector.load %arg5[%c0_9, %c0_10] : memref<128x32xf32, #tpu.memory_space<vmem>>, vector<128x32xf32>
    %10 = tpu.transpose %9, [1, 0] : vector<128x32xf32> -> vector<32x128xf32>
    %c0_11 = arith.constant 0 : index
    %c0_12 = arith.constant 0 : index
    %11 = vector.load %arg6[%c0_11, %c0_12] : memref<128x32xf32, #tpu.memory_space<vmem>>, vector<128x32xf32>
    %12 = tpu.transpose %11, [1, 0] : vector<128x32xf32> -> vector<32x128xf32>
    %c0_13 = arith.constant 0 : index
    %c0_14 = arith.constant 0 : index
    %13 = vector.load %arg7[%c0_13, %c0_14] : memref<128x32xf32, #tpu.memory_space<vmem>>, vector<128x32xf32>
    %14 = tpu.transpose %13, [1, 0] : vector<128x32xf32> -> vector<32x128xf32>
    %c0_15 = arith.constant 0 : index
    %c0_16 = arith.constant 0 : index
    %15 = vector.load %arg8[%c0_15, %c0_16] : memref<128x32xf32, #tpu.memory_space<vmem>>, vector<128x32xf32>
    %16 = tpu.transpose %15, [1, 0] : vector<128x32xf32> -> vector<32x128xf32>
    %17 = vector.broadcast %0 : vector<32x1xf32> to vector<32x128xf32>
    %18 = arith.mulf %2, %17 : vector<32x128xf32>
    %cst = arith.constant dense<0.000000e+00> : vector<128xf32>
    %19 = vector.multi_reduction <add>, %18, %cst [0] : vector<32x128xf32> to vector<128xf32>
    %20 = vector.shape_cast %19 : vector<128xf32> to vector<1x128xf32>
    %21 = vector.broadcast %0 : vector<32x1xf32> to vector<32x128xf32>
    %22 = arith.mulf %4, %21 : vector<32x128xf32>
    %cst_17 = arith.constant dense<0.000000e+00> : vector<128xf32>
    %23 = vector.multi_reduction <add>, %22, %cst_17 [0] : vector<32x128xf32> to vector<128xf32>
    %24 = vector.shape_cast %23 : vector<128xf32> to vector<1x128xf32>
    %25 = vector.broadcast %0 : vector<32x1xf32> to vector<32x128xf32>
    %26 = arith.mulf %6, %25 : vector<32x128xf32>
    %cst_18 = arith.constant dense<0.000000e+00> : vector<128xf32>
    %27 = vector.multi_reduction <add>, %26, %cst_18 [0] : vector<32x128xf32> to vector<128xf32>
    %28 = vector.shape_cast %27 : vector<128xf32> to vector<1x128xf32>
    %29 = vector.broadcast %0 : vector<32x1xf32> to vector<32x128xf32>
    %30 = arith.mulf %8, %29 : vector<32x128xf32>
    %cst_19 = arith.constant dense<0.000000e+00> : vector<128xf32>
    %31 = vector.multi_reduction <add>, %30, %cst_19 [0] : vector<32x128xf32> to vector<128xf32>
    %32 = vector.shape_cast %31 : vector<128xf32> to vector<1x128xf32>
    %33 = vector.broadcast %0 : vector<32x1xf32> to vector<32x128xf32>
    %34 = arith.mulf %10, %33 : vector<32x128xf32>
    %cst_20 = arith.constant dense<0.000000e+00> : vector<128xf32>
    %35 = vector.multi_reduction <add>, %34, %cst_20 [0] : vector<32x128xf32> to vector<128xf32>
    %36 = vector.shape_cast %35 : vector<128xf32> to vector<1x128xf32>
    %37 = vector.broadcast %0 : vector<32x1xf32> to vector<32x128xf32>
    %38 = arith.mulf %12, %37 : vector<32x128xf32>
    %cst_21 = arith.constant dense<0.000000e+00> : vector<128xf32>
    %39 = vector.multi_reduction <add>, %38, %cst_21 [0] : vector<32x128xf32> to vector<128xf32>
    %40 = vector.shape_cast %39 : vector<128xf32> to vector<1x128xf32>
    %41 = vector.broadcast %0 : vector<32x1xf32> to vector<32x128xf32>
    %42 = arith.mulf %14, %41 : vector<32x128xf32>
    %cst_22 = arith.constant dense<0.000000e+00> : vector<128xf32>
    %43 = vector.multi_reduction <add>, %42, %cst_22 [0] : vector<32x128xf32> to vector<128xf32>
    %44 = vector.shape_cast %43 : vector<128xf32> to vector<1x128xf32>
    %45 = vector.broadcast %0 : vector<32x1xf32> to vector<32x128xf32>
    %46 = arith.mulf %16, %45 : vector<32x128xf32>
    %cst_23 = arith.constant dense<0.000000e+00> : vector<128xf32>
    %47 = vector.multi_reduction <add>, %46, %cst_23 [0] : vector<32x128xf32> to vector<128xf32>
    %48 = vector.shape_cast %47 : vector<128xf32> to vector<1x128xf32>
    %49 = arith.maximumf %20, %24 : vector<1x128xf32>
    %50 = arith.maximumf %49, %28 : vector<1x128xf32>
    %51 = arith.maximumf %50, %32 : vector<1x128xf32>
    %52 = arith.maximumf %51, %36 : vector<1x128xf32>
    %53 = arith.maximumf %52, %40 : vector<1x128xf32>
    %54 = arith.maximumf %53, %44 : vector<1x128xf32>
    %55 = arith.maximumf %54, %48 : vector<1x128xf32>
    %56 = arith.subf %20, %55 : vector<1x128xf32>
    %57 = math.exp %56 : vector<1x128xf32>
    %58 = arith.subf %24, %55 : vector<1x128xf32>
    %59 = math.exp %58 : vector<1x128xf32>
    %60 = arith.subf %28, %55 : vector<1x128xf32>
    %61 = math.exp %60 : vector<1x128xf32>
    %62 = arith.subf %32, %55 : vector<1x128xf32>
    %63 = math.exp %62 : vector<1x128xf32>
    %64 = arith.subf %36, %55 : vector<1x128xf32>
    %65 = math.exp %64 : vector<1x128xf32>
    %66 = arith.subf %40, %55 : vector<1x128xf32>
    %67 = math.exp %66 : vector<1x128xf32>
    %68 = arith.subf %44, %55 : vector<1x128xf32>
    %69 = math.exp %68 : vector<1x128xf32>
    %70 = arith.subf %48, %55 : vector<1x128xf32>
    %71 = math.exp %70 : vector<1x128xf32>
    %72 = arith.addf %57, %59 : vector<1x128xf32>
    %73 = arith.addf %72, %61 : vector<1x128xf32>
    %74 = arith.addf %73, %63 : vector<1x128xf32>
    %75 = arith.addf %74, %65 : vector<1x128xf32>
    %76 = arith.addf %75, %67 : vector<1x128xf32>
    %77 = arith.addf %76, %69 : vector<1x128xf32>
    %78 = arith.addf %77, %71 : vector<1x128xf32>
    %79 = tpu.reciprocal %78 {approx = true} : vector<1x128xf32> -> vector<1x128xf32>
    %80 = arith.mulf %78, %79 : vector<1x128xf32>
    %cst_24 = arith.constant 2.000000e+00 : f32
    %81 = vector.broadcast %cst_24 : f32 to vector<1x128xf32>
    %82 = arith.subf %81, %80 : vector<1x128xf32>
    %83 = arith.mulf %79, %82 : vector<1x128xf32>
    %84 = arith.mulf %57, %83 : vector<1x128xf32>
    %85 = arith.mulf %59, %83 : vector<1x128xf32>
    %86 = arith.mulf %61, %83 : vector<1x128xf32>
    %87 = arith.mulf %63, %83 : vector<1x128xf32>
    %88 = arith.mulf %65, %83 : vector<1x128xf32>
    %89 = arith.mulf %67, %83 : vector<1x128xf32>
    %90 = arith.mulf %69, %83 : vector<1x128xf32>
    %91 = arith.mulf %71, %83 : vector<1x128xf32>
    %92 = vector.broadcast %84 : vector<1x128xf32> to vector<32x128xf32>
    %93 = arith.mulf %2, %92 : vector<32x128xf32>
    %94 = vector.broadcast %85 : vector<1x128xf32> to vector<32x128xf32>
    %95 = arith.mulf %4, %94 : vector<32x128xf32>
    %96 = arith.addf %93, %95 : vector<32x128xf32>
    %97 = vector.broadcast %86 : vector<1x128xf32> to vector<32x128xf32>
    %98 = arith.mulf %6, %97 : vector<32x128xf32>
    %99 = arith.addf %96, %98 : vector<32x128xf32>
    %100 = vector.broadcast %87 : vector<1x128xf32> to vector<32x128xf32>
    %101 = arith.mulf %8, %100 : vector<32x128xf32>
    %102 = arith.addf %99, %101 : vector<32x128xf32>
    %103 = vector.broadcast %88 : vector<1x128xf32> to vector<32x128xf32>
    %104 = arith.mulf %10, %103 : vector<32x128xf32>
    %105 = arith.addf %102, %104 : vector<32x128xf32>
    %106 = vector.broadcast %89 : vector<1x128xf32> to vector<32x128xf32>
    %107 = arith.mulf %12, %106 : vector<32x128xf32>
    %108 = arith.addf %105, %107 : vector<32x128xf32>
    %109 = vector.broadcast %90 : vector<1x128xf32> to vector<32x128xf32>
    %110 = arith.mulf %14, %109 : vector<32x128xf32>
    %111 = arith.addf %108, %110 : vector<32x128xf32>
    %112 = vector.broadcast %91 : vector<1x128xf32> to vector<32x128xf32>
    %113 = arith.mulf %16, %112 : vector<32x128xf32>
    %114 = arith.addf %111, %113 : vector<32x128xf32>
    %cst_25 = arith.constant dense<0.000000e+00> : vector<128xf32>
    %115 = vector.multi_reduction <add>, %114, %cst_25 [0] : vector<32x128xf32> to vector<128xf32>
    %116 = vector.shape_cast %115 : vector<128xf32> to vector<1x128xf32>
    %cst_26 = arith.constant 3.200000e+01 : f32
    %117 = vector.broadcast %cst_26 : f32 to vector<1x128xf32>
    %118 = arith.divf %116, %117 : vector<1x128xf32>
    %119 = vector.broadcast %118 : vector<1x128xf32> to vector<32x128xf32>
    %120 = arith.subf %114, %119 : vector<32x128xf32>
    %121 = arith.mulf %120, %120 : vector<32x128xf32>
    %cst_27 = arith.constant dense<0.000000e+00> : vector<128xf32>
    %122 = vector.multi_reduction <add>, %121, %cst_27 [0] : vector<32x128xf32> to vector<128xf32>
    %123 = vector.shape_cast %122 : vector<128xf32> to vector<1x128xf32>
    %cst_28 = arith.constant 3.200000e+01 : f32
    %124 = vector.broadcast %cst_28 : f32 to vector<1x128xf32>
    %125 = arith.divf %123, %124 : vector<1x128xf32>
    %cst_29 = arith.constant 9.99999974E-6 : f32
    %126 = vector.broadcast %cst_29 : f32 to vector<1x128xf32>
    %127 = arith.addf %125, %126 : vector<1x128xf32>
    %128 = math.rsqrt %127 : vector<1x128xf32>
    %129 = vector.broadcast %128 : vector<1x128xf32> to vector<32x128xf32>
    %130 = arith.mulf %120, %129 : vector<32x128xf32>
    %c0_30 = arith.constant 0 : index
    %c0_31 = arith.constant 0 : index
    %131 = vector.load %arg10[%c0_30, %c0_31] : memref<32x1xf32, #tpu.memory_space<vmem>>, vector<32x1xf32>
    %132 = vector.broadcast %131 : vector<32x1xf32> to vector<32x128xf32>
    %133 = arith.mulf %130, %132 : vector<32x128xf32>
    %c0_32 = arith.constant 0 : index
    %c0_33 = arith.constant 0 : index
    %134 = vector.load %arg11[%c0_32, %c0_33] : memref<32x1xf32, #tpu.memory_space<vmem>>, vector<32x1xf32>
    %135 = vector.broadcast %134 : vector<32x1xf32> to vector<32x128xf32>
    %136 = arith.addf %133, %135 : vector<32x128xf32>
    %c0_34 = arith.constant 0 : index
    %c0_35 = arith.constant 0 : index
    %137 = vector.load %arg12[%c0_34, %c0_35] : memref<16x32xf32, #tpu.memory_space<vmem>>, vector<16x32xf32>
    %cst_36 = arith.constant dense<0.000000e+00> : vector<16x128xf32>
    %138 = tpu.matmul %137, %136, %cst_36 {dimension_numbers = #tpu.dot_dimension_numbers<[1], [0], [0], [1], [0, 0, 1, 1], [], []>} : vector<16x32xf32>, vector<32x128xf32>, vector<16x128xf32> -> vector<16x128xf32>
    %c0_37 = arith.constant 0 : index
    %c0_38 = arith.constant 0 : index
    %139 = vector.load %arg13[%c0_37, %c0_38] : memref<16x1xf32, #tpu.memory_space<vmem>>, vector<16x1xf32>
    %140 = vector.broadcast %139 : vector<16x1xf32> to vector<16x128xf32>
    %141 = arith.addf %138, %140 : vector<16x128xf32>
    %cst_39 = arith.constant 0.000000e+00 : f32
    %142 = vector.broadcast %cst_39 : f32 to vector<16x128xf32>
    %143 = arith.maximumf %141, %142 : vector<16x128xf32>
    %c0_40 = arith.constant 0 : index
    %c0_41 = arith.constant 0 : index
    %144 = vector.load %arg14[%c0_40, %c0_41] : memref<16x128xf32, #tpu.memory_space<vmem>>, vector<16x128xf32>
    tpu.vector_store %arg14[%c0_40, %c0_41], %143 {strides = array<i32>} : memref<16x128xf32, #tpu.memory_space<vmem>>, vector<16x128xf32>,
    %145 = tpu.concatenate %84, %85, %86, %87, %88, %89, %90, %91 in 0 : vector<1x128xf32>, vector<1x128xf32>, vector<1x128xf32>, vector<1x128xf32>, vector<1x128xf32>, vector<1x128xf32>, vector<1x128xf32>, vector<1x128xf32> -> vector<8x128xf32>
    %c0_42 = arith.constant 0 : index
    %c0_43 = arith.constant 0 : index
    %146 = vector.load %arg15[%c0_42, %c0_43] : memref<8x128xf32, #tpu.memory_space<vmem>>, vector<8x128xf32>
    tpu.vector_store %arg15[%c0_42, %c0_43], %145 {strides = array<i32>} : memref<8x128xf32, #tpu.memory_space<vmem>>, vector<8x128xf32>,
    return
  }
  func.func @transform_0(%arg0: i32) -> (i32, i32) {
    %c0_i32 = arith.constant 0 : i32
    %c0_i32_0 = arith.constant 0 : i32
    return %arg0, %c0_i32 : i32, i32
  }
  func.func @transform_1(%arg0: i32) -> (i32, i32) {
    %c0_i32 = arith.constant 0 : i32
    %c0_i32_0 = arith.constant 0 : i32
    return %arg0, %c0_i32 : i32, i32
  }
  func.func @transform_2(%arg0: i32) -> (i32, i32) {
    %c0_i32 = arith.constant 0 : i32
    %c0_i32_0 = arith.constant 0 : i32
    return %arg0, %c0_i32 : i32, i32
  }
  func.func @transform_3(%arg0: i32) -> (i32, i32) {
    %c0_i32 = arith.constant 0 : i32
    %c0_i32_0 = arith.constant 0 : i32
    return %arg0, %c0_i32 : i32, i32
  }
  func.func @transform_4(%arg0: i32) -> (i32, i32) {
    %c0_i32 = arith.constant 0 : i32
    %c0_i32_0 = arith.constant 0 : i32
    return %arg0, %c0_i32 : i32, i32
  }
  func.func @transform_5(%arg0: i32) -> (i32, i32) {
    %c0_i32 = arith.constant 0 : i32
    %c0_i32_0 = arith.constant 0 : i32
    return %arg0, %c0_i32 : i32, i32
  }
  func.func @transform_6(%arg0: i32) -> (i32, i32) {
    %c0_i32 = arith.constant 0 : i32
    %c0_i32_0 = arith.constant 0 : i32
    return %arg0, %c0_i32 : i32, i32
  }
  func.func @transform_7(%arg0: i32) -> (i32, i32) {
    %c0_i32 = arith.constant 0 : i32
    %c0_i32_0 = arith.constant 0 : i32
    return %arg0, %c0_i32 : i32, i32
  }
  func.func @transform_8(%arg0: i32) -> (i32, i32) {
    %c0_i32 = arith.constant 0 : i32
    %c0_i32_0 = arith.constant 0 : i32
    %c0_i32_1 = arith.constant 0 : i32
    return %c0_i32, %c0_i32_0 : i32, i32
  }
  func.func @transform_9(%arg0: i32) -> (i32, i32) {
    %c0_i32 = arith.constant 0 : i32
    %c0_i32_0 = arith.constant 0 : i32
    %c0_i32_1 = arith.constant 0 : i32
    return %c0_i32, %c0_i32_0 : i32, i32
  }
  func.func @transform_10(%arg0: i32) -> (i32, i32) {
    %c0_i32 = arith.constant 0 : i32
    %c0_i32_0 = arith.constant 0 : i32
    %c0_i32_1 = arith.constant 0 : i32
    return %c0_i32, %c0_i32_0 : i32, i32
  }
  func.func @transform_11(%arg0: i32) -> (i32, i32) {
    %c0_i32 = arith.constant 0 : i32
    %c0_i32_0 = arith.constant 0 : i32
    %c0_i32_1 = arith.constant 0 : i32
    return %c0_i32, %c0_i32_0 : i32, i32
  }
  func.func @transform_12(%arg0: i32) -> (i32, i32) {
    %c0_i32 = arith.constant 0 : i32
    %c0_i32_0 = arith.constant 0 : i32
    %c0_i32_1 = arith.constant 0 : i32
    return %c0_i32, %c0_i32_0 : i32, i32
  }
  func.func @transform_13(%arg0: i32) -> (i32, i32) {
    %c0_i32 = arith.constant 0 : i32
    %c0_i32_0 = arith.constant 0 : i32
    return %c0_i32, %arg0 : i32, i32
  }
  func.func @transform_14(%arg0: i32) -> (i32, i32) {
    %c0_i32 = arith.constant 0 : i32
    %c0_i32_0 = arith.constant 0 : i32
    return %c0_i32, %arg0 : i32, i32
  }
}

</mosaic_0001>

<llo_original>
// kernel: tpu_custom_call.1
$region0: #{tpu_custom_call.1}
  #allocation0 [shape = 'u32[]', space=smem, size = 0x4, offset = 0x4, fixed_abs, tag = 'smem constant byte address 0x4 - core index']
  #allocation1 [shape = 'u32[144,128]{1,0:T(1,128)}', space=vmem, size = 0x12000, scoped, tag = 'internal scratch']
  %s0 = inlined_call_operand.vmem [shape: f32[8,32], index: 0, kind: input, shape index: {}]
  %s1 = inlined_call_operand.vmem [shape: f32[8,32], index: 1, kind: input, shape index: {}]
  %s2 = inlined_call_operand.vmem [shape: f32[8,32], index: 2, kind: input, shape index: {}]
  %s3 = inlined_call_operand.vmem [shape: f32[8,32], index: 3, kind: input, shape index: {}]
  %s4 = inlined_call_operand.vmem [shape: f32[8,32], index: 4, kind: input, shape index: {}]
  %s5 = inlined_call_operand.vmem [shape: f32[8,32], index: 5, kind: input, shape index: {}]
  %s6 = inlined_call_operand.vmem [shape: f32[8,32], index: 6, kind: input, shape index: {}]
  %s7 = inlined_call_operand.vmem [shape: f32[8,32], index: 7, kind: input, shape index: {}]
  %s8 = inlined_call_operand.vmem [shape: f32[32,1], index: 8, kind: input, shape index: {}]
  %s9 = inlined_call_operand.vmem [shape: f32[32,1], index: 9, kind: input, shape index: {}]
  %s10 = inlined_call_operand.vmem [shape: f32[32,1], index: 10, kind: input, shape index: {}]
  %s11 = inlined_call_operand.vmem [shape: f32[16,32], index: 11, kind: input, shape index: {}]
  %s12 = inlined_call_operand.vmem [shape: f32[16,1], index: 12, kind: input, shape index: {}]
  %s13 = inlined_call_operand.vmem [shape: f32[16,8], index: 13, kind: output, shape index: {0}]
  %s14 = inlined_call_operand.hbm [shape: f32[8,8], index: 14, kind: output, shape index: {1}]
  %15 = xla_tuple %s13, %s14
  %s16 = sld [smem:[#allocation0]]
  $region70: #{tpu_custom_call.1} parent=0
    _
  %s18 = ssub.s32 1, %s16
  %s19 = scalar_select 0, %s18, %s16
  $region1: #{tpu_custom_call.1} parent=0
    #allocation2 [shape = 'u8[4096]{0}', space=vmem, size = 0x1000, scoped, tag = 'output window, operand 1, single buffered']
    #allocation3 [shape = 's32[1]{0}', space=sflag, size = 0x4, scoped, tag = 'scoped memory for tpu_custom_call.1']
    %20 = vsyncpa [#allocation3], 0
    // Predicated region
    $region2: #{tpu_custom_call.1} parent=1 // pred_check
      _
    $region3: #{tpu_custom_call.1} parent=1 // pred_check_branch
      %22 = sbr.rel (0) target = $region5
    $region4: #{tpu_custom_call.1} parent=1 // pred_region
      _
    $region5: #{tpu_custom_call.1} parent=1 // pred_fallthru
      _
    // Predicated region
    $region6: #{tpu_custom_call.1} parent=1 // pred_check
      _
    $region7: #{tpu_custom_call.1} parent=1 // pred_check_branch
      %24 = sbr.rel (0) target = $region9
    $region8: #{tpu_custom_call.1} parent=1 // pred_region
      _
    $region9: #{tpu_custom_call.1} parent=1 // pred_fallthru
      _
    // Predicated region
    $region10: #{tpu_custom_call.1} parent=1 // pred_check
      _
    $region11: #{tpu_custom_call.1} parent=1 // pred_check_branch
      %26 = sbr.rel (0) target = $region13
    $region12: #{tpu_custom_call.1} parent=1 // pred_region
      _
    $region13: #{tpu_custom_call.1} parent=1 // pred_fallthru
      _
    // Predicated region
    $region14: #{tpu_custom_call.1} parent=1 // pred_check
      _
    $region15: #{tpu_custom_call.1} parent=1 // pred_check_branch
      %28 = sbr.rel (0) target = $region17
    $region16: #{tpu_custom_call.1} parent=1 // pred_region
      _
    $region17: #{tpu_custom_call.1} parent=1 // pred_fallthru
      _
    // Predicated region
    $region18: #{tpu_custom_call.1} parent=1 // pred_check
      _
    $region19: #{tpu_custom_call.1} parent=1 // pred_check_branch
      %30 = sbr.rel (0) target = $region21
    $region20: #{tpu_custom_call.1} parent=1 // pred_region
      _
    $region21: #{tpu_custom_call.1} parent=1 // pred_fallthru
      _
    // Predicated region
    $region22: #{tpu_custom_call.1} parent=1 // pred_check
      _
    $region23: #{tpu_custom_call.1} parent=1 // pred_check_branch
      %32 = sbr.rel (0) target = $region25
    $region24: #{tpu_custom_call.1} parent=1 // pred_region
      _
    $region25: #{tpu_custom_call.1} parent=1 // pred_fallthru
      _
    // Predicated region
    $region26: #{tpu_custom_call.1} parent=1 // pred_check
      _
    $region27: #{tpu_custom_call.1} parent=1 // pred_check_branch
      %34 = sbr.rel (0) target = $region29
    $region28: #{tpu_custom_call.1} parent=1 // pred_region
      _
    $region29: #{tpu_custom_call.1} parent=1 // pred_fallthru
      _
    // Predicated region
    $region30: #{tpu_custom_call.1} parent=1 // pred_check
      _
    $region31: #{tpu_custom_call.1} parent=1 // pred_check_branch
      %36 = sbr.rel (0) target = $region33
    $region32: #{tpu_custom_call.1} parent=1 // pred_region
      _
    $region33: #{tpu_custom_call.1} parent=1 // pred_fallthru
      _
    // Predicated region
    $region34: #{tpu_custom_call.1} parent=1 // pred_check
      _
    $region35: #{tpu_custom_call.1} parent=1 // pred_check_branch
      %38 = sbr.rel (0) target = $region37
    $region36: #{tpu_custom_call.1} parent=1 // pred_region
      _
    $region37: #{tpu_custom_call.1} parent=1 // pred_fallthru
      _
    // Predicated region
    $region38: #{tpu_custom_call.1} parent=1 // pred_check
      _
    $region39: #{tpu_custom_call.1} parent=1 // pred_check_branch
      %40 = sbr.rel (0) target = $region41
    $region40: #{tpu_custom_call.1} parent=1 // pred_region
      _
    $region41: #{tpu_custom_call.1} parent=1 // pred_fallthru
      _
    // Predicated region
    $region42: #{tpu_custom_call.1} parent=1 // pred_check
      _
    $region43: #{tpu_custom_call.1} parent=1 // pred_check_branch
      %42 = sbr.rel (0) target = $region45
    $region44: #{tpu_custom_call.1} parent=1 // pred_region
      _
    $region45: #{tpu_custom_call.1} parent=1 // pred_fallthru
      _
    // Predicated region
    $region46: #{tpu_custom_call.1} parent=1 // pred_check
      _
    $region47: #{tpu_custom_call.1} parent=1 // pred_check_branch
      %44 = sbr.rel (0) target = $region49
    $region48: #{tpu_custom_call.1} parent=1 // pred_region
      _
    $region49: #{tpu_custom_call.1} parent=1 // pred_fallthru
      _
    // Predicated region
    $region50: #{tpu_custom_call.1} parent=1 // pred_check
      _
    $region51: #{tpu_custom_call.1} parent=1 // pred_check_branch
      %46 = sbr.rel (0) target = $region53
    $region52: #{tpu_custom_call.1} parent=1 // pred_region
      _
    $region53: #{tpu_custom_call.1} parent=1 // pred_fallthru
      _
    %v47 = vld [vmem:[%s8] sm:$0xff]
    %v48 = vld [vmem:[%s8 + $0x8] sm:$0xff]
    %v49 = vld [vmem:[%s8 + $0x10] sm:$0xff]
    %v50 = vld [vmem:[%s8 + $0x18] sm:$0xff]
    %v51 = vld [vmem:[%s0] sm:$0xff]
    %v52 = vld [vmem:[%s0 + $0x8] sm:$0xff]
    %v53 = vld [vmem:[%s0 + $0x10] sm:$0xff]
    %v54 = vld [vmem:[%s0 + $0x18] sm:$0xff]
    %v55 = vld [vmem:[%s0 + $0x20] sm:$0xff]
    %v56 = vld [vmem:[%s0 + $0x28] sm:$0xff]
    %v57 = vld [vmem:[%s0 + $0x30] sm:$0xff]
    %v58 = vld [vmem:[%s0 + $0x38] sm:$0xff]
    %v59 = vld [vmem:[%s0 + $0x40] sm:$0xff]
    %v60 = vld [vmem:[%s0 + $0x48] sm:$0xff]
    %v61 = vld [vmem:[%s0 + $0x50] sm:$0xff]
    %v62 = vld [vmem:[%s0 + $0x58] sm:$0xff]
    %v63 = vld [vmem:[%s0 + $0x60] sm:$0xff]
    %v64 = vld [vmem:[%s0 + $0x68] sm:$0xff]
    %v65 = vld [vmem:[%s0 + $0x70] sm:$0xff]
    %v66 = vld [vmem:[%s0 + $0x78] sm:$0xff]
    %67 = vxpose.xlu0.b32.start [1/16] %v51, 128
    %68 = vxpose.xlu0.b32.cont [2/16] %v52, 128
    %69 = vxpose.xlu0.b32.cont [3/16] %v53, 128
    %70 = vxpose.xlu0.b32.cont [4/16] %v54, 128
    %71 = vxpose.xlu0.b32.cont [5/16] %v55, 128
    %72 = vxpose.xlu0.b32.cont [6/16] %v56, 128
    %73 = vxpose.xlu0.b32.cont [7/16] %v57, 128
    %74 = vxpose.xlu0.b32.cont [8/16] %v58, 128
    %75 = vxpose.xlu0.b32.cont [9/16] %v59, 128
    %76 = vxpose.xlu0.b32.cont [10/16] %v60, 128
    %77 = vxpose.xlu0.b32.cont [11/16] %v61, 128
    %78 = vxpose.xlu0.b32.cont [12/16] %v62, 128
    %79 = vxpose.xlu0.b32.cont [13/16] %v63, 128
    %80 = vxpose.xlu0.b32.cont [14/16] %v64, 128
    %81 = vxpose.xlu0.b32.cont [15/16] %v65, 128
    %82 = vxpose.xlu0.b32.end [16/16] %v66, 128
    %v83 = vpop.trf.xlu0
    %v84 = vpop.trf.xlu0
    %v85 = vpop.trf.xlu0
    %v86 = vpop.trf.xlu0
    %v87 = vpop.trf.xlu0
    %v88 = vpop.trf.xlu0
    %v89 = vpop.trf.xlu0
    %v90 = vpop.trf.xlu0
    %v91 = vpop.trf.xlu0
    %v92 = vpop.trf.xlu0
    %v93 = vpop.trf.xlu0
    %v94 = vpop.trf.xlu0
    %v95 = vpop.trf.xlu0
    %v96 = vpop.trf.xlu0
    %v97 = vpop.trf.xlu0
    %v98 = vpop.trf.xlu0
    %v99 = vld [vmem:[%s1] sm:$0xff]
    %v100 = vld [vmem:[%s1 + $0x8] sm:$0xff]
    %v101 = vld [vmem:[%s1 + $0x10] sm:$0xff]
    %v102 = vld [vmem:[%s1 + $0x18] sm:$0xff]
    %v103 = vld [vmem:[%s1 + $0x20] sm:$0xff]
    %v104 = vld [vmem:[%s1 + $0x28] sm:$0xff]
    %v105 = vld [vmem:[%s1 + $0x30] sm:$0xff]
    %v106 = vld [vmem:[%s1 + $0x38] sm:$0xff]
    %v107 = vld [vmem:[%s1 + $0x40] sm:$0xff]
    %v108 = vld [vmem:[%s1 + $0x48] sm:$0xff]
    %v109 = vld [vmem:[%s1 + $0x50] sm:$0xff]
    %v110 = vld [vmem:[%s1 + $0x58] sm:$0xff]
    %v111 = vld [vmem:[%s1 + $0x60] sm:$0xff]
    %v112 = vld [vmem:[%s1 + $0x68] sm:$0xff]
    %v113 = vld [vmem:[%s1 + $0x70] sm:$0xff]
    %v114 = vld [vmem:[%s1 + $0x78] sm:$0xff]
    %115 = vxpose.xlu0.b32.start [1/16] %v99, 128
    %116 = vxpose.xlu0.b32.cont [2/16] %v100, 128
    %117 = vxpose.xlu0.b32.cont [3/16] %v101, 128
    %118 = vxpose.xlu0.b32.cont [4/16] %v102, 128
    %119 = vxpose.xlu0.b32.cont [5/16] %v103, 128
    %120 = vxpose.xlu0.b32.cont [6/16] %v104, 128
    %121 = vxpose.xlu0.b32.cont [7/16] %v105, 128
    %122 = vxpose.xlu0.b32.cont [8/16] %v106, 128
    %123 = vxpose.xlu0.b32.cont [9/16] %v107, 128
    %124 = vxpose.xlu0.b32.cont [10/16] %v108, 128
    %125 = vxpose.xlu0.b32.cont [11/16] %v109, 128
    %126 = vxpose.xlu0.b32.cont [12/16] %v110, 128
    %127 = vxpose.xlu0.b32.cont [13/16] %v111, 128
    %128 = vxpose.xlu0.b32.cont [14/16] %v112, 128
    %129 = vxpose.xlu0.b32.cont [15/16] %v113, 128
    %130 = vxpose.xlu0.b32.end [16/16] %v114, 128
    %v131 = vpop.trf.xlu0
    %v132 = vpop.trf.xlu0
    %v133 = vpop.trf.xlu0
    %v134 = vpop.trf.xlu0
    %v135 = vpop.trf.xlu0
    %v136 = vpop.trf.xlu0
    %v137 = vpop.trf.xlu0
    %v138 = vpop.trf.xlu0
    %v139 = vpop.trf.xlu0
    %v140 = vpop.trf.xlu0
    %v141 = vpop.trf.xlu0
    %v142 = vpop.trf.xlu0
    %v143 = vpop.trf.xlu0
    %v144 = vpop.trf.xlu0
    %v145 = vpop.trf.xlu0
    %v146 = vpop.trf.xlu0
    %v147 = vld [vmem:[%s2] sm:$0xff]
    %v148 = vld [vmem:[%s2 + $0x8] sm:$0xff]
    %v149 = vld [vmem:[%s2 + $0x10] sm:$0xff]
    %v150 = vld [vmem:[%s2 + $0x18] sm:$0xff]
    %v151 = vld [vmem:[%s2 + $0x20] sm:$0xff]
    %v152 = vld [vmem:[%s2 + $0x28] sm:$0xff]
    %v153 = vld [vmem:[%s2 + $0x30] sm:$0xff]
    %v154 = vld [vmem:[%s2 + $0x38] sm:$0xff]
    %v155 = vld [vmem:[%s2 + $0x40] sm:$0xff]
    %v156 = vld [vmem:[%s2 + $0x48] sm:$0xff]
    %v157 = vld [vmem:[%s2 + $0x50] sm:$0xff]
    %v158 = vld [vmem:[%s2 + $0x58] sm:$0xff]
    %v159 = vld [vmem:[%s2 + $0x60] sm:$0xff]
    %v160 = vld [vmem:[%s2 + $0x68] sm:$0xff]
    %v161 = vld [vmem:[%s2 + $0x70] sm:$0xff]
    %v162 = vld [vmem:[%s2 + $0x78] sm:$0xff]
    %163 = vxpose.xlu0.b32.start [1/16] %v147, 128
    %164 = vxpose.xlu0.b32.cont [2/16] %v148, 128
    %165 = vxpose.xlu0.b32.cont [3/16] %v149, 128
    %166 = vxpose.xlu0.b32.cont [4/16] %v150, 128
    %167 = vxpose.xlu0.b32.cont [5/16] %v151, 128
    %168 = vxpose.xlu0.b32.cont [6/16] %v152, 128
    %169 = vxpose.xlu0.b32.cont [7/16] %v153, 128
    %170 = vxpose.xlu0.b32.cont [8/16] %v154, 128
    %171 = vxpose.xlu0.b32.cont [9/16] %v155, 128
    %172 = vxpose.xlu0.b32.cont [10/16] %v156, 128
    %173 = vxpose.xlu0.b32.cont [11/16] %v157, 128
    %174 = vxpose.xlu0.b32.cont [12/16] %v158, 128
    %175 = vxpose.xlu0.b32.cont [13/16] %v159, 128
    %176 = vxpose.xlu0.b32.cont [14/16] %v160, 128
    %177 = vxpose.xlu0.b32.cont [15/16] %v161, 128
    %178 = vxpose.xlu0.b32.end [16/16] %v162, 128
    %v179 = vpop.trf.xlu0
    %v180 = vpop.trf.xlu0
    %v181 = vpop.trf.xlu0
    %v182 = vpop.trf.xlu0
    %v183 = vpop.trf.xlu0
    %v184 = vpop.trf.xlu0
    %v185 = vpop.trf.xlu0
    %v186 = vpop.trf.xlu0
    %v187 = vpop.trf.xlu0
    %v188 = vpop.trf.xlu0
    %v189 = vpop.trf.xlu0
    %v190 = vpop.trf.xlu0
    %v191 = vpop.trf.xlu0
    %v192 = vpop.trf.xlu0
    %v193 = vpop.trf.xlu0
    %v194 = vpop.trf.xlu0
    %v195 = vld [vmem:[%s3] sm:$0xff]
    %v196 = vld [vmem:[%s3 + $0x8] sm:$0xff]
    %v197 = vld [vmem:[%s3 + $0x10] sm:$0xff]
    %v198 = vld [vmem:[%s3 + $0x18] sm:$0xff]
    %v199 = vld [vmem:[%s3 + $0x20] sm:$0xff]
    %v200 = vld [vmem:[%s3 + $0x28] sm:$0xff]
    %v201 = vld [vmem:[%s3 + $0x30] sm:$0xff]
    %v202 = vld [vmem:[%s3 + $0x38] sm:$0xff]
    %v203 = vld [vmem:[%s3 + $0x40] sm:$0xff]
    %v204 = vld [vmem:[%s3 + $0x48] sm:$0xff]
    %v205 = vld [vmem:[%s3 + $0x50] sm:$0xff]
    %v206 = vld [vmem:[%s3 + $0x58] sm:$0xff]
    %v207 = vld [vmem:[%s3 + $0x60] sm:$0xff]
    %v208 = vld [vmem:[%s3 + $0x68] sm:$0xff]
    %v209 = vld [vmem:[%s3 + $0x70] sm:$0xff]
    %v210 = vld [vmem:[%s3 + $0x78] sm:$0xff]
    %211 = vxpose.xlu0.b32.start [1/16] %v195, 128
    %212 = vxpose.xlu0.b32.cont [2/16] %v196, 128
    %213 = vxpose.xlu0.b32.cont [3/16] %v197, 128
    %214 = vxpose.xlu0.b32.cont [4/16] %v198, 128
    %215 = vxpose.xlu0.b32.cont [5/16] %v199, 128
    %216 = vxpose.xlu0.b32.cont [6/16] %v200, 128
    %217 = vxpose.xlu0.b32.cont [7/16] %v201, 128
    %218 = vxpose.xlu0.b32.cont [8/16] %v202, 128
    %219 = vxpose.xlu0.b32.cont [9/16] %v203, 128
    %220 = vxpose.xlu0.b32.cont [10/16] %v204, 128
    %221 = vxpose.xlu0.b32.cont [11/16] %v205, 128
    %222 = vxpose.xlu0.b32.cont [12/16] %v206, 128
    %223 = vxpose.xlu0.b32.cont [13/16] %v207, 128
    %224 = vxpose.xlu0.b32.cont [14/16] %v208, 128
    %225 = vxpose.xlu0.b32.cont [15/16] %v209, 128
    %226 = vxpose.xlu0.b32.end [16/16] %v210, 128
    %v227 = vpop.trf.xlu0
    %v228 = vpop.trf.xlu0
    %v229 = vpop.trf.xlu0
    %v230 = vpop.trf.xlu0
    %v231 = vpop.trf.xlu0
    %v232 = vpop.trf.xlu0
    %v233 = vpop.trf.xlu0
    %v234 = vpop.trf.xlu0
    %v235 = vpop.trf.xlu0
    %v236 = vpop.trf.xlu0
    %v237 = vpop.trf.xlu0
    %v238 = vpop.trf.xlu0
    %v239 = vpop.trf.xlu0
    %v240 = vpop.trf.xlu0
    %v241 = vpop.trf.xlu0
    %v242 = vpop.trf.xlu0
    %v243 = vld [vmem:[%s4] sm:$0xff]
    %v244 = vld [vmem:[%s4 + $0x8] sm:$0xff]
    %v245 = vld [vmem:[%s4 + $0x10] sm:$0xff]
    %v246 = vld [vmem:[%s4 + $0x18] sm:$0xff]
    %v247 = vld [vmem:[%s4 + $0x20] sm:$0xff]
    %v248 = vld [vmem:[%s4 + $0x28] sm:$0xff]
    %v249 = vld [vmem:[%s4 + $0x30] sm:$0xff]
    %v250 = vld [vmem:[%s4 + $0x38] sm:$0xff]
    %v251 = vld [vmem:[%s4 + $0x40] sm:$0xff]
    %v252 = vld [vmem:[%s4 + $0x48] sm:$0xff]
    %v253 = vld [vmem:[%s4 + $0x50] sm:$0xff]
    %v254 = vld [vmem:[%s4 + $0x58] sm:$0xff]
    %v255 = vld [vmem:[%s4 + $0x60] sm:$0xff]
    %v256 = vld [vmem:[%s4 + $0x68] sm:$0xff]
    %v257 = vld [vmem:[%s4 + $0x70] sm:$0xff]
    %v258 = vld [vmem:[%s4 + $0x78] sm:$0xff]
    %259 = vxpose.xlu0.b32.start [1/16] %v243, 128
    %260 = vxpose.xlu0.b32.cont [2/16] %v244, 128
    %261 = vxpose.xlu0.b32.cont [3/16] %v245, 128
    %262 = vxpose.xlu0.b32.cont [4/16] %v246, 128
    %263 = vxpose.xlu0.b32.cont [5/16] %v247, 128
    %264 = vxpose.xlu0.b32.cont [6/16] %v248, 128
    %265 = vxpose.xlu0.b32.cont [7/16] %v249, 128
    %266 = vxpose.xlu0.b32.cont [8/16] %v250, 128
    %267 = vxpose.xlu0.b32.cont [9/16] %v251, 128
    %268 = vxpose.xlu0.b32.cont [10/16] %v252, 128
    %269 = vxpose.xlu0.b32.cont [11/16] %v253, 128
    %270 = vxpose.xlu0.b32.cont [12/16] %v254, 128
    %271 = vxpose.xlu0.b32.cont [13/16] %v255, 128
    %272 = vxpose.xlu0.b32.cont [14/16] %v256, 128
    %273 = vxpose.xlu0.b32.cont [15/16] %v257, 128
    %274 = vxpose.xlu0.b32.end [16/16] %v258, 128
    %v275 = vpop.trf.xlu0
    %v276 = vpop.trf.xlu0
    %v277 = vpop.trf.xlu0
    %v278 = vpop.trf.xlu0
    %v279 = vpop.trf.xlu0
    %v280 = vpop.trf.xlu0
    %v281 = vpop.trf.xlu0
    %v282 = vpop.trf.xlu0
    %v283 = vpop.trf.xlu0
    %v284 = vpop.trf.xlu0
    %v285 = vpop.trf.xlu0
    %v286 = vpop.trf.xlu0
    %v287 = vpop.trf.xlu0
    %v288 = vpop.trf.xlu0
    %v289 = vpop.trf.xlu0
    %v290 = vpop.trf.xlu0
    %v291 = vld [vmem:[%s5] sm:$0xff]
    %v292 = vld [vmem:[%s5 + $0x8] sm:$0xff]
    %v293 = vld [vmem:[%s5 + $0x10] sm:$0xff]
    %v294 = vld [vmem:[%s5 + $0x18] sm:$0xff]
    %v295 = vld [vmem:[%s5 + $0x20] sm:$0xff]
    %v296 = vld [vmem:[%s5 + $0x28] sm:$0xff]
    %v297 = vld [vmem:[%s5 + $0x30] sm:$0xff]
    %v298 = vld [vmem:[%s5 + $0x38] sm:$0xff]
    %v299 = vld [vmem:[%s5 + $0x40] sm:$0xff]
    %v300 = vld [vmem:[%s5 + $0x48] sm:$0xff]
    %v301 = vld [vmem:[%s5 + $0x50] sm:$0xff]
    %v302 = vld [vmem:[%s5 + $0x58] sm:$0xff]
    %v303 = vld [vmem:[%s5 + $0x60] sm:$0xff]
    %v304 = vld [vmem:[%s5 + $0x68] sm:$0xff]
    %v305 = vld [vmem:[%s5 + $0x70] sm:$0xff]
    %v306 = vld [vmem:[%s5 + $0x78] sm:$0xff]
    %307 = vxpose.xlu0.b32.start [1/16] %v291, 128
    %308 = vxpose.xlu0.b32.cont [2/16] %v292, 128
    %309 = vxpose.xlu0.b32.cont [3/16] %v293, 128
    %310 = vxpose.xlu0.b32.cont [4/16] %v294, 128
    %311 = vxpose.xlu0.b32.cont [5/16] %v295, 128
    %312 = vxpose.xlu0.b32.cont [6/16] %v296, 128
    %313 = vxpose.xlu0.b32.cont [7/16] %v297, 128
    %314 = vxpose.xlu0.b32.cont [8/16] %v298, 128
    %315 = vxpose.xlu0.b32.cont [9/16] %v299, 128
    %316 = vxpose.xlu0.b32.cont [10/16] %v300, 128
    %317 = vxpose.xlu0.b32.cont [11/16] %v301, 128
    %318 = vxpose.xlu0.b32.cont [12/16] %v302, 128
    %319 = vxpose.xlu0.b32.cont [13/16] %v303, 128
    %320 = vxpose.xlu0.b32.cont [14/16] %v304, 128
    %321 = vxpose.xlu0.b32.cont [15/16] %v305, 128
    %322 = vxpose.xlu0.b32.end [16/16] %v306, 128
    %v323 = vpop.trf.xlu0
    %v324 = vpop.trf.xlu0
    %v325 = vpop.trf.xlu0
    %v326 = vpop.trf.xlu0
    %v327 = vpop.trf.xlu0
    %v328 = vpop.trf.xlu0
    %v329 = vpop.trf.xlu0
    %v330 = vpop.trf.xlu0
    %v331 = vpop.trf.xlu0
    %v332 = vpop.trf.xlu0
    %v333 = vpop.trf.xlu0
    %v334 = vpop.trf.xlu0
    %v335 = vpop.trf.xlu0
    %v336 = vpop.trf.xlu0
    %v337 = vpop.trf.xlu0
    %v338 = vpop.trf.xlu0
    %v339 = vld [vmem:[%s6] sm:$0xff]
    %v340 = vld [vmem:[%s6 + $0x8] sm:$0xff]
    %v341 = vld [vmem:[%s6 + $0x10] sm:$0xff]
    %v342 = vld [vmem:[%s6 + $0x18] sm:$0xff]
    %v343 = vld [vmem:[%s6 + $0x20] sm:$0xff]
    %v344 = vld [vmem:[%s6 + $0x28] sm:$0xff]
    %v345 = vld [vmem:[%s6 + $0x30] sm:$0xff]
    %v346 = vld [vmem:[%s6 + $0x38] sm:$0xff]
    %v347 = vld [vmem:[%s6 + $0x40] sm:$0xff]
    %v348 = vld [vmem:[%s6 + $0x48] sm:$0xff]
    %v349 = vld [vmem:[%s6 + $0x50] sm:$0xff]
    %v350 = vld [vmem:[%s6 + $0x58] sm:$0xff]
    %v351 = vld [vmem:[%s6 + $0x60] sm:$0xff]
    %v352 = vld [vmem:[%s6 + $0x68] sm:$0xff]
    %v353 = vld [vmem:[%s6 + $0x70] sm:$0xff]
    %v354 = vld [vmem:[%s6 + $0x78] sm:$0xff]
    %355 = vxpose.xlu0.b32.start [1/16] %v339, 128
    %356 = vxpose.xlu0.b32.cont [2/16] %v340, 128
    %357 = vxpose.xlu0.b32.cont [3/16] %v341, 128
    %358 = vxpose.xlu0.b32.cont [4/16] %v342, 128
    %359 = vxpose.xlu0.b32.cont [5/16] %v343, 128
    %360 = vxpose.xlu0.b32.cont [6/16] %v344, 128
    %361 = vxpose.xlu0.b32.cont [7/16] %v345, 128
    %362 = vxpose.xlu0.b32.cont [8/16] %v346, 128
    %363 = vxpose.xlu0.b32.cont [9/16] %v347, 128
    %364 = vxpose.xlu0.b32.cont [10/16] %v348, 128
    %365 = vxpose.xlu0.b32.cont [11/16] %v349, 128
    %366 = vxpose.xlu0.b32.cont [12/16] %v350, 128
    %367 = vxpose.xlu0.b32.cont [13/16] %v351, 128
    %368 = vxpose.xlu0.b32.cont [14/16] %v352, 128
    %369 = vxpose.xlu0.b32.cont [15/16] %v353, 128
    %370 = vxpose.xlu0.b32.end [16/16] %v354, 128
    %v371 = vpop.trf.xlu0
    %v372 = vpop.trf.xlu0
    %v373 = vpop.trf.xlu0
    %v374 = vpop.trf.xlu0
    %v375 = vpop.trf.xlu0
    %v376 = vpop.trf.xlu0
    %v377 = vpop.trf.xlu0
    %v378 = vpop.trf.xlu0
    %v379 = vpop.trf.xlu0
    %v380 = vpop.trf.xlu0
    %v381 = vpop.trf.xlu0
    %v382 = vpop.trf.xlu0
    %v383 = vpop.trf.xlu0
    %v384 = vpop.trf.xlu0
    %v385 = vpop.trf.xlu0
    %v386 = vpop.trf.xlu0
    %v387 = vld [vmem:[%s7] sm:$0xff]
    %v388 = vld [vmem:[%s7 + $0x8] sm:$0xff]
    %v389 = vld [vmem:[%s7 + $0x10] sm:$0xff]
    %v390 = vld [vmem:[%s7 + $0x18] sm:$0xff]
    %v391 = vld [vmem:[%s7 + $0x20] sm:$0xff]
    %v392 = vld [vmem:[%s7 + $0x28] sm:$0xff]
    %v393 = vld [vmem:[%s7 + $0x30] sm:$0xff]
    %v394 = vld [vmem:[%s7 + $0x38] sm:$0xff]
    %v395 = vld [vmem:[%s7 + $0x40] sm:$0xff]
    %v396 = vld [vmem:[%s7 + $0x48] sm:$0xff]
    %v397 = vld [vmem:[%s7 + $0x50] sm:$0xff]
    %v398 = vld [vmem:[%s7 + $0x58] sm:$0xff]
    %v399 = vld [vmem:[%s7 + $0x60] sm:$0xff]
    %v400 = vld [vmem:[%s7 + $0x68] sm:$0xff]
    %v401 = vld [vmem:[%s7 + $0x70] sm:$0xff]
    %v402 = vld [vmem:[%s7 + $0x78] sm:$0xff]
    %403 = vxpose.xlu0.b32.start [1/16] %v387, 128
    %404 = vxpose.xlu0.b32.cont [2/16] %v388, 128
    %405 = vxpose.xlu0.b32.cont [3/16] %v389, 128
    %406 = vxpose.xlu0.b32.cont [4/16] %v390, 128
    %407 = vxpose.xlu0.b32.cont [5/16] %v391, 128
    %408 = vxpose.xlu0.b32.cont [6/16] %v392, 128
    %409 = vxpose.xlu0.b32.cont [7/16] %v393, 128
    %410 = vxpose.xlu0.b32.cont [8/16] %v394, 128
    %411 = vxpose.xlu0.b32.cont [9/16] %v395, 128
    %412 = vxpose.xlu0.b32.cont [10/16] %v396, 128
    %413 = vxpose.xlu0.b32.cont [11/16] %v397, 128
    %414 = vxpose.xlu0.b32.cont [12/16] %v398, 128
    %415 = vxpose.xlu0.b32.cont [13/16] %v399, 128
    %416 = vxpose.xlu0.b32.cont [14/16] %v400, 128
    %417 = vxpose.xlu0.b32.cont [15/16] %v401, 128
    %418 = vxpose.xlu0.b32.end [16/16] %v402, 128
    %v419 = vpop.trf.xlu0
    %v420 = vpop.trf.xlu0
    %v421 = vpop.trf.xlu0
    %v422 = vpop.trf.xlu0
    %v423 = vpop.trf.xlu0
    %v424 = vpop.trf.xlu0
    %v425 = vpop.trf.xlu0
    %v426 = vpop.trf.xlu0
    %v427 = vpop.trf.xlu0
    %v428 = vpop.trf.xlu0
    %v429 = vpop.trf.xlu0
    %v430 = vpop.trf.xlu0
    %v431 = vpop.trf.xlu0
    %v432 = vpop.trf.xlu0
    %v433 = vpop.trf.xlu0
    %v434 = vpop.trf.xlu0
    %436 = vset.pattern.permute.xlu0 0
    %437 = vperm.xlu0 %436, %v47
    %v438 = vpop.permute.xlu0 %437
    %441 = vset.pattern.permute.xlu0 0
    %442 = vperm.xlu0 %441, %v48
    %v443 = vpop.permute.xlu0 %442
    %446 = vset.pattern.permute.xlu0 0
    %447 = vperm.xlu0 %446, %v49
    %v448 = vpop.permute.xlu0 %447
    %451 = vset.pattern.permute.xlu0 0
    %452 = vperm.xlu0 %451, %v50
    %v453 = vpop.permute.xlu0 %452
    %v455 = vmul.f32 %v83, %v438
    %v456 = vmul.f32 %v84, %v443
    %v457 = vmul.f32 %v85, %v448
    %v458 = vmul.f32 %v86, %v453
    %v459 = vadd.f32 %v455, %v456
    %v460 = vadd.f32 %v459, %v457
    %v461 = vadd.f32 %v460, %v458
    %v462 = vrot.slane %v461, 4
    %v463 = vadd.f32 %v461, %v462
    %v464 = vrot.slane %v463, 2
    %v465 = vadd.f32 %v463, %v464
    %v466 = vrot.slane %v465, 1
    %v467 = vadd.f32 %v465, %v466
    %v468 = vmul.f32 %v131, %v438
    %v469 = vmul.f32 %v132, %v443
    %v470 = vmul.f32 %v133, %v448
    %v471 = vmul.f32 %v134, %v453
    %v472 = vadd.f32 %v468, %v469
    %v473 = vadd.f32 %v472, %v470
    %v474 = vadd.f32 %v473, %v471
    %v475 = vrot.slane %v474, 4
    %v476 = vadd.f32 %v474, %v475
    %v477 = vrot.slane %v476, 2
    %v478 = vadd.f32 %v476, %v477
    %v479 = vrot.slane %v478, 1
    %v480 = vadd.f32 %v478, %v479
    %v481 = vmul.f32 %v179, %v438
    %v482 = vmul.f32 %v180, %v443
    %v483 = vmul.f32 %v181, %v448
    %v484 = vmul.f32 %v182, %v453
    %v485 = vadd.f32 %v481, %v482
    %v486 = vadd.f32 %v485, %v483
    %v487 = vadd.f32 %v486, %v484
    %v488 = vrot.slane %v487, 4
    %v489 = vadd.f32 %v487, %v488
    %v490 = vrot.slane %v489, 2
    %v491 = vadd.f32 %v489, %v490
    %v492 = vrot.slane %v491, 1
    %v493 = vadd.f32 %v491, %v492
    %v494 = vmul.f32 %v227, %v438
    %v495 = vmul.f32 %v228, %v443
    %v496 = vmul.f32 %v229, %v448
    %v497 = vmul.f32 %v230, %v453
    %v498 = vadd.f32 %v494, %v495
    %v499 = vadd.f32 %v498, %v496
    %v500 = vadd.f32 %v499, %v497
    %v501 = vrot.slane %v500, 4
    %v502 = vadd.f32 %v500, %v501
    %v503 = vrot.slane %v502, 2
    %v504 = vadd.f32 %v502, %v503
    %v505 = vrot.slane %v504, 1
    %v506 = vadd.f32 %v504, %v505
    %v507 = vmul.f32 %v275, %v438
    %v508 = vmul.f32 %v276, %v443
    %v509 = vmul.f32 %v277, %v448
    %v510 = vmul.f32 %v278, %v453
    %v511 = vadd.f32 %v507, %v508
    %v512 = vadd.f32 %v511, %v509
    %v513 = vadd.f32 %v512, %v510
    %v514 = vrot.slane %v513, 4
    %v515 = vadd.f32 %v513, %v514
    %v516 = vrot.slane %v515, 2
    %v517 = vadd.f32 %v515, %v516
    %v518 = vrot.slane %v517, 1
    %v519 = vadd.f32 %v517, %v518
    %v520 = vmul.f32 %v323, %v438
    %v521 = vmul.f32 %v324, %v443
    %v522 = vmul.f32 %v325, %v448
    %v523 = vmul.f32 %v326, %v453
    %v524 = vadd.f32 %v520, %v521
    %v525 = vadd.f32 %v524, %v522
    %v526 = vadd.f32 %v525, %v523
    %v527 = vrot.slane %v526, 4
    %v528 = vadd.f32 %v526, %v527
    %v529 = vrot.slane %v528, 2
    %v530 = vadd.f32 %v528, %v529
    %v531 = vrot.slane %v530, 1
    %v532 = vadd.f32 %v530, %v531
    %v533 = vmul.f32 %v371, %v438
    %v534 = vmul.f32 %v372, %v443
    %v535 = vmul.f32 %v373, %v448
    %v536 = vmul.f32 %v374, %v453
    %v537 = vadd.f32 %v533, %v534
    %v538 = vadd.f32 %v537, %v535
    %v539 = vadd.f32 %v538, %v536
    %v540 = vrot.slane %v539, 4
    %v541 = vadd.f32 %v539, %v540
    %v542 = vrot.slane %v541, 2
    %v543 = vadd.f32 %v541, %v542
    %v544 = vrot.slane %v543, 1
    %v545 = vadd.f32 %v543, %v544
    %v546 = vmul.f32 %v419, %v438
    %v547 = vmul.f32 %v420, %v443
    %v548 = vmul.f32 %v421, %v448
    %v549 = vmul.f32 %v422, %v453
    %v550 = vadd.f32 %v546, %v547
    %v551 = vadd.f32 %v550, %v548
    %v552 = vadd.f32 %v551, %v549
    %v553 = vrot.slane %v552, 4
    %v554 = vadd.f32 %v552, %v553
    %v555 = vrot.slane %v554, 2
    %v556 = vadd.f32 %v554, %v555
    %v557 = vrot.slane %v556, 1
    %v558 = vadd.f32 %v556, %v557
    %v559 = vmax.f32 %v467, %v480
    %v560 = vmax.f32 %v559, %v493
    %v561 = vmax.f32 %v560, %v506
    %v562 = vmax.f32 %v561, %v519
    %v563 = vmax.f32 %v562, %v532
    %v564 = vmax.f32 %v563, %v545
    %v565 = vmax.f32 %v564, %v558
    %v566 = vsub.f32 %v467, %v565
    %v567 = vmul.f32 %v566, 1.442695
    %v568 = vpow.pop %v567
    %v569 = vsub.f32 %v480, %v565
    %v570 = vmul.f32 %v569, 1.442695
    %v571 = vpow.pop %v570
    %v572 = vsub.f32 %v493, %v565
    %v573 = vmul.f32 %v572, 1.442695
    %v574 = vpow.pop %v573
    %v575 = vsub.f32 %v506, %v565
    %v576 = vmul.f32 %v575, 1.442695
    %v577 = vpow.pop %v576
    %v578 = vsub.f32 %v519, %v565
    %v579 = vmul.f32 %v578, 1.442695
    %v580 = vpow.pop %v579
    %v581 = vsub.f32 %v532, %v565
    %v582 = vmul.f32 %v581, 1.442695
    %v583 = vpow.pop %v582
    %v584 = vsub.f32 %v545, %v565
    %v585 = vmul.f32 %v584, 1.442695
    %v586 = vpow.pop %v585
    %v587 = vsub.f32 %v558, %v565
    %v588 = vmul.f32 %v587, 1.442695
    %v589 = vpow.pop %v588
    %v590 = vadd.f32 %v568, %v571
    %v591 = vadd.f32 %v590, %v574
    %v592 = vadd.f32 %v591, %v577
    %v593 = vadd.f32 %v592, %v580
    %v594 = vadd.f32 %v593, %v583
    %v595 = vadd.f32 %v594, %v586
    %v596 = vadd.f32 %v595, %v589
    %v597 = vrcp.pop %v596
    %v598 = vmul.f32 %v596, %v597
    %v599 = vsub.f32 2.0, %v598
    %v600 = vmul.f32 %v597, %v599
    %v601 = vmul.f32 %v568, %v600
    %v602 = vmul.f32 %v571, %v600
    %v603 = vmul.f32 %v574, %v600
    %v604 = vmul.f32 %v577, %v600
    %v605 = vmul.f32 %v580, %v600
    %v606 = vmul.f32 %v583, %v600
    %v607 = vmul.f32 %v586, %v600
    %v608 = vmul.f32 %v589, %v600
    %v609 = vmul.f32 %v83, %v601
    %v610 = vmul.f32 %v84, %v601
    %v611 = vmul.f32 %v85, %v601
    %v612 = vmul.f32 %v86, %v601
    %v613 = vmul.f32 %v131, %v602
    %v614 = vmul.f32 %v132, %v602
    %v615 = vmul.f32 %v133, %v602
    %v616 = vmul.f32 %v134, %v602
    %v617 = vadd.f32 %v609, %v613
    %v618 = vadd.f32 %v610, %v614
    %v619 = vadd.f32 %v611, %v615
    %v620 = vadd.f32 %v612, %v616
    %v621 = vmul.f32 %v179, %v603
    %v622 = vmul.f32 %v180, %v603
    %v623 = vmul.f32 %v181, %v603
    %v624 = vmul.f32 %v182, %v603
    %v625 = vadd.f32 %v617, %v621
    %v626 = vadd.f32 %v618, %v622
    %v627 = vadd.f32 %v619, %v623
    %v628 = vadd.f32 %v620, %v624
    %v629 = vmul.f32 %v227, %v604
    %v630 = vmul.f32 %v228, %v604
    %v631 = vmul.f32 %v229, %v604
    %v632 = vmul.f32 %v230, %v604
    %v633 = vadd.f32 %v625, %v629
    %v634 = vadd.f32 %v626, %v630
    %v635 = vadd.f32 %v627, %v631
    %v636 = vadd.f32 %v628, %v632
    %v637 = vmul.f32 %v275, %v605
    %v638 = vmul.f32 %v276, %v605
    %v639 = vmul.f32 %v277, %v605
    %v640 = vmul.f32 %v278, %v605
    %v641 = vadd.f32 %v633, %v637
    %v642 = vadd.f32 %v634, %v638
    %v643 = vadd.f32 %v635, %v639
    %v644 = vadd.f32 %v636, %v640
    %v645 = vmul.f32 %v323, %v606
    %v646 = vmul.f32 %v324, %v606
    %v647 = vmul.f32 %v325, %v606
    %v648 = vmul.f32 %v326, %v606
    %v649 = vadd.f32 %v641, %v645
    %v650 = vadd.f32 %v642, %v646
    %v651 = vadd.f32 %v643, %v647
    %v652 = vadd.f32 %v644, %v648
    %v653 = vmul.f32 %v371, %v607
    %v654 = vmul.f32 %v372, %v607
    %v655 = vmul.f32 %v373, %v607
    %v656 = vmul.f32 %v374, %v607
    %v657 = vadd.f32 %v649, %v653
    %v658 = vadd.f32 %v650, %v654
    %v659 = vadd.f32 %v651, %v655
    %v660 = vadd.f32 %v652, %v656
    %v661 = vmul.f32 %v419, %v608
    %v662 = vmul.f32 %v420, %v608
    %v663 = vmul.f32 %v421, %v608
    %v664 = vmul.f32 %v422, %v608
    %v665 = vadd.f32 %v657, %v661
    %v666 = vadd.f32 %v658, %v662
    %v667 = vadd.f32 %v659, %v663
    %v668 = vadd.f32 %v660, %v664
    %v669 = vadd.f32 %v665, %v666
    %v670 = vadd.f32 %v669, %v667
    %v671 = vadd.f32 %v670, %v668
    %v672 = vrot.slane %v671, 4
    %v673 = vadd.f32 %v671, %v672
    %v674 = vrot.slane %v673, 2
    %v675 = vadd.f32 %v673, %v674
    %v676 = vrot.slane %v675, 1
    %v677 = vadd.f32 %v675, %v676
    %v678 = vrcp.pop 32.0
    %v679 = vmul.f32 %v677, %v678
    %v680 = vsub.f32 %v665, %v679
    %v681 = vsub.f32 %v666, %v679
    %v682 = vsub.f32 %v667, %v679
    %v683 = vsub.f32 %v668, %v679
    %v684 = vmul.f32 %v680, %v680
    %v685 = vmul.f32 %v681, %v681
    %v686 = vmul.f32 %v682, %v682
    %v687 = vmul.f32 %v683, %v683
    %v688 = vadd.f32 %v684, %v685
    %v689 = vadd.f32 %v688, %v686
    %v690 = vadd.f32 %v689, %v687
    %v691 = vrot.slane %v690, 4
    %v692 = vadd.f32 %v690, %v691
    %v693 = vrot.slane %v692, 2
    %v694 = vadd.f32 %v692, %v693
    %v695 = vrot.slane %v694, 1
    %v696 = vadd.f32 %v694, %v695
    %v697 = vmul.f32 %v696, %v678
    %v698 = vadd.f32 %v697, 1e-05
    %v699 = vrsqrt.pop %v698
    %v700 = vmul.f32 %v680, %v699
    %v701 = vmul.f32 %v681, %v699
    %v702 = vmul.f32 %v682, %v699
    %v703 = vmul.f32 %v683, %v699
    %v704 = vld [vmem:[%s9] sm:$0xff]
    %v705 = vld [vmem:[%s9 + $0x8] sm:$0xff]
    %v706 = vld [vmem:[%s9 + $0x10] sm:$0xff]
    %v707 = vld [vmem:[%s9 + $0x18] sm:$0xff]
    %709 = vset.pattern.permute.xlu0 0
    %710 = vperm.xlu0 %709, %v704
    %v711 = vpop.permute.xlu0 %710
    %714 = vset.pattern.permute.xlu0 0
    %715 = vperm.xlu0 %714, %v705
    %v716 = vpop.permute.xlu0 %715
    %719 = vset.pattern.permute.xlu0 0
    %720 = vperm.xlu0 %719, %v706
    %v721 = vpop.permute.xlu0 %720
    %724 = vset.pattern.permute.xlu0 0
    %725 = vperm.xlu0 %724, %v707
    %v726 = vpop.permute.xlu0 %725
    %v728 = vmul.f32 %v700, %v711
    %v729 = vmul.f32 %v701, %v716
    %v730 = vmul.f32 %v702, %v721
    %v731 = vmul.f32 %v703, %v726
    %v732 = vld [vmem:[%s10] sm:$0xff]
    %v733 = vld [vmem:[%s10 + $0x8] sm:$0xff]
    %v734 = vld [vmem:[%s10 + $0x10] sm:$0xff]
    %v735 = vld [vmem:[%s10 + $0x18] sm:$0xff]
    %737 = vset.pattern.permute.xlu0 0
    %738 = vperm.xlu0 %737, %v732
    %v739 = vpop.permute.xlu0 %738
    %742 = vset.pattern.permute.xlu0 0
    %743 = vperm.xlu0 %742, %v733
    %v744 = vpop.permute.xlu0 %743
    %747 = vset.pattern.permute.xlu0 0
    %748 = vperm.xlu0 %747, %v734
    %v749 = vpop.permute.xlu0 %748
    %752 = vset.pattern.permute.xlu0 0
    %753 = vperm.xlu0 %752, %v735
    %v754 = vpop.permute.xlu0 %753
    %v756 = vadd.f32 %v728, %v739
    %v757 = vadd.f32 %v729, %v744
    %v758 = vadd.f32 %v730, %v749
    %v759 = vadd.f32 %v731, %v754
    %v760 = vld [vmem:[%s11] sm:$0xff]
    %v761 = vld [vmem:[%s11 + $0x8] sm:$0xff]
    %v762 = vld [vmem:[%s12] sm:$0xff]
    %v763 = vld [vmem:[%s12 + $0x8] sm:$0xff]
    %765 = vset.pattern.permute.xlu0 0
    %766 = vperm.xlu0 %765, %v762
    %v767 = vpop.permute.xlu0 %766
    %770 = vset.pattern.permute.xlu0 0
    %771 = vperm.xlu0 %770, %v763
    %v772 = vpop.permute.xlu0 %771
    %vm774 = vcmask 261120
    %v776 = vsel %vm774, %v760, 0
    %v779 = vsel %vm774, %v761, 0
    %781 = vmatprep.subr.mxu0 0.0
    %782 = vmatpush1.msra.mxu0 %v756
    %783 = vmatprep.subr.mxu0 0.0
    %784 = vmatpush1.msra.mxu0 %v757
    %785 = vmatprep.subr.mxu0 0.0
    %786 = vmatpush1.msra.mxu0 %v758
    %787 = vmatprep.subr.mxu0 0.0
    %788 = vmatpush1.msra.mxu0 %v759
    %789 = vmatprep.subr.mxu0 0.0
    %790 = vmatpush1.msra.mxu0 0.0
    %791 = vmatprep.subr.mxu0 0.0
    %792 = vmatpush1.msra.mxu0 0.0
    %793 = vmatprep.subr.mxu0 0.0
    %794 = vmatpush1.msra.mxu0 0.0
    %795 = vmatprep.subr.mxu0 0.0
    %796 = vmatpush1.msra.mxu0 0.0
    %797 = vmatprep.subr.mxu0 0.0
    %798 = vmatpush1.msra.mxu0 0.0
    %799 = vmatprep.subr.mxu0 0.0
    %800 = vmatpush1.msra.mxu0 0.0
    %801 = vmatprep.subr.mxu0 0.0
    %802 = vmatpush1.msra.mxu0 0.0
    %803 = vmatprep.subr.mxu0 0.0
    %804 = vmatpush1.msra.mxu0 0.0
    %805 = vmatprep.subr.mxu0 0.0
    %806 = vmatpush1.msra.mxu0 0.0
    %807 = vmatprep.subr.mxu0 0.0
    %808 = vmatpush1.msra.mxu0 0.0
    %809 = vmatprep.subr.mxu0 0.0
    %810 = vmatpush1.msra.mxu0 0.0
    %811 = vmatprep.subr.mxu0 0.0
    %812 = vmatpush1.msra.mxu0 0.0
    %813 = vmatprep.subr.mxu0 0.0
    %814 = vmatpush1.msra.mxu0 0.0
    %815 = vmatprep.subr.mxu0 0.0
    %816 = vmatpush1.msra.mxu0 0.0
    %817 = vmatprep.subr.mxu0 0.0
    %818 = vmatpush1.msra.mxu0 0.0
    %819 = vmatprep.subr.mxu0 0.0
    %820 = vmatpush1.msra.mxu0 0.0
    %821 = vmatprep.subr.mxu0 0.0
    %822 = vmatpush1.msra.mxu0 0.0
    %823 = vmatprep.subr.mxu0 0.0
    %824 = vmatpush1.msra.mxu0 0.0
    %825 = vmatprep.subr.mxu0 0.0
    %826 = vmatpush1.msra.mxu0 0.0
    %827 = vmatprep.subr.mxu0 0.0
    %828 = vmatpush1.msra.mxu0 0.0
    %829 = vmatprep.subr.mxu0 0.0
    %830 = vmatpush1.msra.mxu0 0.0
    %831 = vmatprep.subr.mxu0 0.0
    %832 = vmatpush1.msra.mxu0 0.0
    %833 = vmatprep.subr.mxu0 0.0
    %834 = vmatpush1.msra.mxu0 0.0
    %835 = vmatprep.subr.mxu0 0.0
    %836 = vmatpush1.msra.mxu0 0.0
    %837 = vmatprep.subr.mxu0 0.0
    %838 = vmatpush1.msra.mxu0 0.0
    %839 = vmatprep.subr.mxu0 0.0
    %840 = vmatpush1.msra.mxu0 0.0
    %841 = vmatprep.subr.mxu0 0.0
    %842 = vmatpush1.msra.mxu0 0.0
    %843 = vmatprep.subr.mxu0 0.0
    %844 = vmatpush1.msra.mxu0 0.0
    %845 = vmatprep.mubr.f32.mxu0 0.0
    %846 = vmatmul.mubr.f32.gmra.mrb[0].mxu0 %v776
    %v847 = vpop.f32.mrb[0].mxu0
    %v848 = vadd.f32 %v767, %v847
    %v849 = vpop.f32.mrb[0].mxu0
    %850 = vmatprep.mubr.f32.mxu0 0.0
    %851 = vmatmul.mubr.f32.gmra.mrb[0].mxu0 %v779
    %v852 = vpop.f32.mrb[0].mxu0
    %v853 = vadd.f32 %v772, %v852
    %v854 = vpop.f32.mrb[0].mxu0
    %855 = vdwg.mxu0
    %v856 = vmax.f32 %v848, 0.0
    %v857 = vmax.f32 %v853, 0.0
    %858 = vst [vmem:[%s13] sm:$0xff] %v856
    %859 = vst [vmem:[%s13 + $0x8] sm:$0xff] %v857
    %vm860 = vcmask 1040384
    %v861 = vsel %vm860, %v601, %v602
    %vm862 = vcmask 1041408
    %v863 = vsel %vm862, %v861, %v603
    %vm864 = vcmask 1042432
    %v865 = vsel %vm864, %v863, %v604
    %vm866 = vcmask 1043456
    %v867 = vsel %vm866, %v865, %v605
    %vm868 = vcmask 1044480
    %v869 = vsel %vm868, %v867, %v606
    %vm870 = vcmask 1045504
    %v871 = vsel %vm870, %v869, %v607
    %vm872 = vcmask 1046528
    %v873 = vsel %vm872, %v871, %v608
    %874 = vst [vmem:[#allocation2] sm:$0xff] %v873
    // Predicated region
    $region54: #{tpu_custom_call.1} parent=1 // pred_check
      _
    $region55: #{tpu_custom_call.1} parent=1 // pred_check_branch
      %876 = sbr.rel (0) target = $region57
    $region56: #{tpu_custom_call.1} parent=1 // pred_region
      _
    $region57: #{tpu_custom_call.1} parent=1 // pred_fallthru
      _
    // Predicated region
    $region58: #{tpu_custom_call.1} parent=1 // pred_check
      _
    $region59: #{tpu_custom_call.1} parent=1 // pred_check_branch
      %878 = sbr.rel (0) target = $region61
    $region60: #{tpu_custom_call.1} parent=1 // pred_region
      %s880 = ssub.s32 128, 128
      %881 = vsyncadd [#allocation3], %s880
      %s883 = sshll.u32 [#allocation2], 4
      %s884 = int_to_ptr.vmem [resolvable:$true] %s883
      %886 = dma.vmem_to_hbm [thread:$0]  %s884, 128, %s14, [#allocation3]
    $region61: #{tpu_custom_call.1} parent=1 // pred_fallthru
      _
    // Predicated region
    $region62: #{tpu_custom_call.1} parent=1 // pred_check
      _
    $region63: #{tpu_custom_call.1} parent=1 // pred_check_branch
      %888 = sbr.rel (0) target = $region65
    $region64: #{tpu_custom_call.1} parent=1 // pred_region
      _
    $region65: #{tpu_custom_call.1} parent=1 // pred_fallthru
      _
    // Predicated region
    $region66: #{tpu_custom_call.1} parent=1 // pred_check
      _
    $region67: #{tpu_custom_call.1} parent=1 // pred_check_branch
      %890 = sbr.rel (0) target = $region69
    $region68: #{tpu_custom_call.1} parent=1 // pred_region
      %891 = dma.done [#allocation3], 128
    $region69: #{tpu_custom_call.1} parent=1 // pred_fallthru
      _
    %892 = vsyncpa [#allocation3], 1

</llo_original>
